<compile_context>
chip_gen: v7x
topology: tpu7x:2x2x1
jax: 0.10.0
libtpu: 0.0.40
codegen_flags: <defaults>
</compile_context>

<pallas_src>
import functools
import math

import jax
import jax.numpy as jnp
from jax.experimental import pallas as pl
from jax.experimental.pallas import tpu as pltpu

PHI = 1.618033988749895
INV_PHI = 1.0 / PHI
CONSCIOUSNESS_DIMENSION = 11
LANE = 128          # feature-dim padding (lane width) for the packed params / output slab
NEG_BIG = -1.0e30   # masks padded logit columns out of the softmax


def _round_up(x, m):
    return ((x + m - 1) // m) * m


# ----------------------------------------------------------------------------
# Fused kernel: consciousness add + 3 phi-harmonic layers + output softmax.
# PHI is pre-folded into the packed params, so hidden layers are tanh(x@W+b).
# ----------------------------------------------------------------------------
def _maml_agent_kernel(x_ref, cons_ref, p_ref, pol_ref, *, mm_dtype):
    n_layers, _rows, lane = p_ref.shape          # (4, 136, 128)
    state_dim = x_ref.shape[-1]
    cast = jnp.dtype(mm_dtype) != jnp.dtype(jnp.float32)

    def mm(a, w):
        if cast:  # bf16 operands, f32 accumulate (MXU-native on v5e/v6e/v7x)
            a = a.astype(mm_dtype)
            w = w.astype(mm_dtype)
        return jnp.dot(a, w, preferred_element_type=jnp.float32)

    # consciousness integration (broadcast over the batch rows), f32
    h = x_ref[...] + 0.1 * cons_ref[...]

    # hidden layers: tanh(h @ W + b); first layer uses only K=state_dim weight rows
    k = state_dim
    for i in range(n_layers - 1):
        w = p_ref[i, :k, :]                      # (k, 128) zero-padded weights
        b = p_ref[i, lane:lane + 1, :]           # (1, 128) zero-padded bias (f32)
        h = jnp.tanh(mm(h, w) + b)               # padded cols stay exactly 0
        k = lane

    # output layer + numerically stable softmax.  Padded logit columns carry a
    # -1e30 bias (kept f32) so exp() underflows to 0 and they drop out of the
    # denominator.  Exact divide -> rows sum to 1.0 to f32 rounding.
    w = p_ref[n_layers - 1, :k, :]
    b = p_ref[n_layers - 1, lane:lane + 1, :]
    logits = mm(h, w) + b
    m = jnp.max(logits, axis=-1, keepdims=True)
    e = jnp.exp(logits - m)
    pol_ref[...] = e / jnp.sum(e, axis=-1, keepdims=True)


# ----------------------------------------------------------------------------
# Wrapper
# ----------------------------------------------------------------------------
def maml_game_agent_forward(state, consciousness_state, packed_policy_params,
                            action_dim, *, row_block=512, matmul_dtype=None):
    """Pallas implementation of MAMLGameAgent.forward.

    packed_policy_params: (4, 136, 128) f32 buffer from pack_phi_net_params.
    Returns (policy (B, action_dim), value (B, 1)).
    """
    if state.ndim == 1:
        state = state[None, :]
    state = state.astype(jnp.float32)
    B, state_dim = state.shape
    n_layers, rows, lane = packed_policy_params.shape
    assert state_dim <= lane and action_dim <= lane
    # Module assumes state_dim <= CONSCIOUSNESS_DIMENSION (same as PyTorch spec).
    cons = jnp.asarray(consciousness_state, jnp.float32)[:state_dim].reshape(1, state_dim)

    # Row-block selection:
    #  * tiny batches: single block, no padding (launch-latency bound anyway)
    #  * otherwise: >=2 grid steps (v7x has 2 TCs; grid is sharded via
    #    dimension_semantics), block rows a multiple of 8, capped at row_block.
    if B <= 8:
        block_b = B
    else:
        block_b = min(row_block, _round_up(-(-B // 2), 8))
    Bp = _round_up(B, block_b)
    x = state if Bp == B else jnp.zeros((Bp, state_dim), jnp.float32).at[:B].set(state)

    if matmul_dtype is None:
        # bf16 MXU operands only pay off once blocks are reasonably large.
        matmul_dtype = jnp.bfloat16 if block_b >= 128 else jnp.float32

    kernel = functools.partial(_maml_agent_kernel, mm_dtype=matmul_dtype)
    pol_pad = pl.pallas_call(
        kernel,
        out_shape=jax.ShapeDtypeStruct((Bp, lane), jnp.float32),
        grid=(Bp // block_b,),
        in_specs=[pl.BlockSpec((block_b, state_dim), lambda i: (i, 0)),        # state (natural width)
                  pl.BlockSpec((1, state_dim), lambda i: (0, 0)),              # consciousness row
                  pl.BlockSpec((n_layers, rows, lane), lambda i: (0, 0, 0))],  # packed params (resident)
        out_specs=pl.BlockSpec((block_b, lane), lambda i: (i, 0)),             # lane-dense policy slab
        compiler_params=pltpu.CompilerParams(dimension_semantics=("parallel",)),
    )(x, cons, packed_policy_params)

    policy = pol_pad[:B, :action_dim]
    # Value head: the module applies softmax to a 1-dim output, which is
    # identically 1.0, so its whole network is elided from the kernel.
    # TODO(synk): revisit if the module ever emits a raw (un-softmaxed) value.
    value = jnp.ones((B, 1), jnp.float32)
    return policy, value


# ----------------------------------------------------------------------------
# Parameter construction (deterministic, PyTorch-shape-faithful) + packing
# ----------------------------------------------------------------------------
def _phi_net_dims(input_dim, output_dim):
    hidden_dims = [int(64 * PHI), int(32 * PHI), int(16 * PHI)]   # [103, 51, 25]
    phi_dims = [int(h * PHI / 2) for h in hidden_dims]            # [83, 41, 20]
    return [input_dim] + phi_dims + [output_dim]


def make_phi_net_params(key, input_dim, output_dim):
    """Unpacked params: list of (W (in,out), b (out,)) with PyTorch-default-style init."""
    dims = _phi_net_dims(input_dim, output_dim)
    params = []
    for i in range(len(dims) - 1):
        fan_in, fan_out = dims[i], dims[i + 1]
        key, kw, kb = jax.random.split(key, 3)
        bound = 1.0 / math.sqrt(fan_in)
        w = jax.random.uniform(kw, (fan_in, fan_out), jnp.float32, -bound, bound)
        b = jax.random.uniform(kb, (fan_out,), jnp.float32, -bound, bound)
        params.append((w, b))
    return params


def pack_phi_net_params(params, output_dim, lane=LANE):
    """Pack a PhiHarmonicNetwork into one (n_layers, lane+8, lane) f32 buffer.

    Rows 0..lane-1 of layer i: zero-padded W_i ; row lane: zero-padded b_i.
    PHI folding (so the kernel is plain tanh(x@W+b)):
        layer 0:        W /= phi, b /= phi
        layers 1..n-2:  b /= phi          (phi from previous activation cancels on W)
        output layer:   W *= phi          (b unchanged)
    Padded output-logit columns get a -1e30 bias so the in-kernel softmax over
    the full 128-lane slab equals the exact softmax over output_dim.
    """
    n_layers = len(params)
    rows = lane + 8   # bias row at a sublane-aligned offset, total a multiple of 8
    packed = jnp.zeros((n_layers, rows, lane), jnp.float32)
    for i, (w, b) in enumerate(params):
        w = jnp.asarray(w, jnp.float32)
        b = jnp.asarray(b, jnp.float32)
        if i == 0:
            w = w * INV_PHI
            b = b * INV_PHI
        elif i < n_layers - 1:
            b = b * INV_PHI
        else:
            w = w * PHI
        fi, fo = w.shape
        packed = packed.at[i, :fi, :fo].set(w)
        packed = packed.at[i, lane, :fo].set(b)
    packed = packed.at[n_layers - 1, lane, output_dim:].set(NEG_BIG)
    return packed


# ----------------------------------------------------------------------------
# Pure-JAX reference (exact module semantics) for verification
# ----------------------------------------------------------------------------
def _reference_forward(state, consciousness_state, policy_params, value_params):
    if state.ndim == 1:
        state = state[None, :]
    sd = state.shape[-1]
    cons = jnp.asarray(consciousness_state, jnp.float32)[:sd].reshape(1, sd)
    x0 = state + 0.1 * cons

    def dense(x, w, b):
        return jnp.dot(x, w, precision=jax.lax.Precision.HIGHEST) + b

    def net(x, params):
        *hidden, (wo, bo) = params
        for (w, b) in hidden:
            x = jnp.tanh(dense(x, w, b) / PHI) * PHI
        return jax.nn.softmax(dense(x, wo, bo), axis=-1)

    return net(x0, policy_params), net(x0, value_params)


if __name__ == "__main__":
    key = jax.random.PRNGKey(0)
    batch, state_dim, action_dim = 2, 8, 4

    k_state, k_pol, k_val = jax.random.split(key, 3)
    state = jax.random.normal(k_state, (batch, state_dim), jnp.float32)
    consciousness_state = jnp.zeros((CONSCIOUSNESS_DIMENSION,), jnp.float32)  # module init: zeros

    policy_params = make_phi_net_params(k_pol, state_dim, action_dim)
    # Value net params only feed the reference: its softmax(out_dim=1) is identically
    # 1.0, so the kernel path elides that network entirely.
    value_params = make_phi_net_params(k_val, state_dim, 1)

    packed_policy = pack_phi_net_params(policy_params, action_dim)

    policy, value = maml_game_agent_forward(state, consciousness_state,
                                            packed_policy, action_dim)
    jax.block_until_ready((policy, value))

    ref_policy, ref_value = _reference_forward(state, consciousness_state,
                                               policy_params, value_params)
    assert policy.shape == (batch, action_dim)
    assert value.shape == (batch, 1)
    assert jnp.allclose(policy, ref_policy, atol=1e-3, rtol=1e-3)
    # exact divide in the softmax epilogue -> rows sum to 1 to f32 rounding
    assert jnp.allclose(jnp.sum(policy, axis=-1), 1.0, atol=1e-4)
    assert jnp.allclose(value, ref_value)   # exactly 1.0 on both paths

    print("KERNEL_OK")
</pallas_src>

<mosaic_0001>
module attributes {stable_mosaic.version = 11 : i64} {
  func.func @_maml_agent_kernel(%arg0: i32, %arg1: memref<2x8xf32, #tpu.memory_space<vmem>>, %arg2: memref<1x8xf32, #tpu.memory_space<vmem>>, %arg3: memref<4x136x128xf32, #tpu.memory_space<vmem>>, %arg4: memref<2x128xf32, #tpu.memory_space<vmem>>) attributes {dimension_semantics = [#tpu.dimension_semantics<parallel>], iteration_bounds = array<i64: 1>, scalar_prefetch = 0 : i64, scratch_operands = 0 : i64, tpu.core_type = #tpu.core_type<tc>, window_params = [{transform_indices = @transform_0, window_bounds = array<i64: 2, 8>}, {pipeline_mode = #tpu.pipeline_mode<synchronous>, transform_indices = @transform_1, window_bounds = array<i64: 1, 8>}, {pipeline_mode = #tpu.pipeline_mode<synchronous>, transform_indices = @transform_2, window_bounds = array<i64: 4, 136, 128>}, {transform_indices = @transform_3, window_bounds = array<i64: 2, 128>}]} {
    %c0 = arith.constant 0 : index
    %c0_0 = arith.constant 0 : index
    %0 = vector.load %arg1[%c0, %c0_0] : memref<2x8xf32, #tpu.memory_space<vmem>>, vector<2x8xf32>
    %c0_1 = arith.constant 0 : index
    %c0_2 = arith.constant 0 : index
    %1 = vector.load %arg2[%c0_1, %c0_2] : memref<1x8xf32, #tpu.memory_space<vmem>>, vector<1x8xf32>
    %cst = arith.constant 1.000000e-01 : f32
    %2 = vector.broadcast %cst : f32 to vector<1x8xf32>
    %3 = arith.mulf %2, %1 : vector<1x8xf32>
    %4 = vector.broadcast %3 : vector<1x8xf32> to vector<2x8xf32>
    %5 = arith.addf %0, %4 : vector<2x8xf32>
    %c0_3 = arith.constant 0 : index
    %c0_4 = arith.constant 0 : index
    %c0_5 = arith.constant 0 : index
    %6 = vector.load %arg3[%c0_3, %c0_4, %c0_5] : memref<4x136x128xf32, #tpu.memory_space<vmem>>, vector<1x8x128xf32>
    %7 = vector.shape_cast %6 : vector<1x8x128xf32> to vector<8x128xf32>
    %c0_6 = arith.constant 0 : index
    %c128 = arith.constant 128 : index
    %c0_7 = arith.constant 0 : index
    %8 = vector.load %arg3[%c0_6, %c128, %c0_7] : memref<4x136x128xf32, #tpu.memory_space<vmem>>, vector<1x1x128xf32>
    %9 = vector.shape_cast %8 : vector<1x1x128xf32> to vector<1x128xf32>
    %cst_8 = arith.constant dense<0.000000e+00> : vector<2x128xf32>
    %10 = tpu.matmul %5, %7, %cst_8 {dimension_numbers = #tpu.dot_dimension_numbers<[1], [0], [0], [1], [0, 0, 1, 1], [], []>} : vector<2x8xf32>, vector<8x128xf32>, vector<2x128xf32> -> vector<2x128xf32>
    %11 = vector.broadcast %9 : vector<1x128xf32> to vector<2x128xf32>
    %12 = arith.addf %10, %11 : vector<2x128xf32>
    %13 = math.tanh %12 : vector<2x128xf32>
    %c1 = arith.constant 1 : index
    %c0_9 = arith.constant 0 : index
    %c0_10 = arith.constant 0 : index
    %14 = vector.load %arg3[%c1, %c0_9, %c0_10] : memref<4x136x128xf32, #tpu.memory_space<vmem>>, vector<1x128x128xf32>
    %15 = vector.shape_cast %14 : vector<1x128x128xf32> to vector<128x128xf32>
    %c1_11 = arith.constant 1 : index
    %c128_12 = arith.constant 128 : index
    %c0_13 = arith.constant 0 : index
    %16 = vector.load %arg3[%c1_11, %c128_12, %c0_13] : memref<4x136x128xf32, #tpu.memory_space<vmem>>, vector<1x1x128xf32>
    %17 = vector.shape_cast %16 : vector<1x1x128xf32> to vector<1x128xf32>
    %cst_14 = arith.constant dense<0.000000e+00> : vector<2x128xf32>
    %18 = tpu.matmul %13, %15, %cst_14 {dimension_numbers = #tpu.dot_dimension_numbers<[1], [0], [0], [1], [0, 0, 1, 1], [], []>} : vector<2x128xf32>, vector<128x128xf32>, vector<2x128xf32> -> vector<2x128xf32>
    %19 = vector.broadcast %17 : vector<1x128xf32> to vector<2x128xf32>
    %20 = arith.addf %18, %19 : vector<2x128xf32>
    %21 = math.tanh %20 : vector<2x128xf32>
    %c2 = arith.constant 2 : index
    %c0_15 = arith.constant 0 : index
    %c0_16 = arith.constant 0 : index
    %22 = vector.load %arg3[%c2, %c0_15, %c0_16] : memref<4x136x128xf32, #tpu.memory_space<vmem>>, vector<1x128x128xf32>
    %23 = vector.shape_cast %22 : vector<1x128x128xf32> to vector<128x128xf32>
    %c2_17 = arith.constant 2 : index
    %c128_18 = arith.constant 128 : index
    %c0_19 = arith.constant 0 : index
    %24 = vector.load %arg3[%c2_17, %c128_18, %c0_19] : memref<4x136x128xf32, #tpu.memory_space<vmem>>, vector<1x1x128xf32>
    %25 = vector.shape_cast %24 : vector<1x1x128xf32> to vector<1x128xf32>
    %cst_20 = arith.constant dense<0.000000e+00> : vector<2x128xf32>
    %26 = tpu.matmul %21, %23, %cst_20 {dimension_numbers = #tpu.dot_dimension_numbers<[1], [0], [0], [1], [0, 0, 1, 1], [], []>} : vector<2x128xf32>, vector<128x128xf32>, vector<2x128xf32> -> vector<2x128xf32>
    %27 = vector.broadcast %25 : vector<1x128xf32> to vector<2x128xf32>
    %28 = arith.addf %26, %27 : vector<2x128xf32>
    %29 = math.tanh %28 : vector<2x128xf32>
    %c3 = arith.constant 3 : index
    %c0_21 = arith.constant 0 : index
    %c0_22 = arith.constant 0 : index
    %30 = vector.load %arg3[%c3, %c0_21, %c0_22] : memref<4x136x128xf32, #tpu.memory_space<vmem>>, vector<1x128x128xf32>
    %31 = vector.shape_cast %30 : vector<1x128x128xf32> to vector<128x128xf32>
    %c3_23 = arith.constant 3 : index
    %c128_24 = arith.constant 128 : index
    %c0_25 = arith.constant 0 : index
    %32 = vector.load %arg3[%c3_23, %c128_24, %c0_25] : memref<4x136x128xf32, #tpu.memory_space<vmem>>, vector<1x1x128xf32>
    %33 = vector.shape_cast %32 : vector<1x1x128xf32> to vector<1x128xf32>
    %cst_26 = arith.constant dense<0.000000e+00> : vector<2x128xf32>
    %34 = tpu.matmul %29, %31, %cst_26 {dimension_numbers = #tpu.dot_dimension_numbers<[1], [0], [0], [1], [0, 0, 1, 1], [], []>} : vector<2x128xf32>, vector<128x128xf32>, vector<2x128xf32> -> vector<2x128xf32>
    %35 = vector.broadcast %33 : vector<1x128xf32> to vector<2x128xf32>
    %36 = arith.addf %34, %35 : vector<2x128xf32>
    %cst_27 = arith.constant dense<0xFF800000> : vector<2xf32>
    %37 = vector.multi_reduction <maximumf>, %36, %cst_27 [1] : vector<2x128xf32> to vector<2xf32>
    %38 = vector.shape_cast %37 : vector<2xf32> to vector<2x1xf32>
    %39 = vector.broadcast %38 : vector<2x1xf32> to vector<2x128xf32>
    %40 = arith.subf %36, %39 : vector<2x128xf32>
    %41 = math.exp %40 : vector<2x128xf32>
    %cst_28 = arith.constant dense<0.000000e+00> : vector<2xf32>
    %42 = vector.multi_reduction <add>, %41, %cst_28 [1] : vector<2x128xf32> to vector<2xf32>
    %43 = vector.shape_cast %42 : vector<2xf32> to vector<2x1xf32>
    %44 = vector.broadcast %43 : vector<2x1xf32> to vector<2x128xf32>
    %45 = arith.divf %41, %44 : vector<2x128xf32>
    %c0_29 = arith.constant 0 : index
    %c0_30 = arith.constant 0 : index
    %46 = vector.load %arg4[%c0_29, %c0_30] : memref<2x128xf32, #tpu.memory_space<vmem>>, vector<2x128xf32>
    tpu.vector_store %arg4[%c0_29, %c0_30], %45 {strides = array<i32>} : memref<2x128xf32, #tpu.memory_space<vmem>>, vector<2x128xf32>,
    return
  }
  func.func @transform_0(%arg0: i32) -> (i32, i32) {
    %c0_i32 = arith.constant 0 : i32
    %c0_i32_0 = arith.constant 0 : i32
    return %arg0, %c0_i32 : i32, i32
  }
  func.func @transform_1(%arg0: i32) -> (i32, i32) {
    %c0_i32 = arith.constant 0 : i32
    %c0_i32_0 = arith.constant 0 : i32
    %c0_i32_1 = arith.constant 0 : i32
    return %c0_i32, %c0_i32_0 : i32, i32
  }
  func.func @transform_2(%arg0: i32) -> (i32, i32, i32) {
    %c0_i32 = arith.constant 0 : i32
    %c0_i32_0 = arith.constant 0 : i32
    %c0_i32_1 = arith.constant 0 : i32
    %c0_i32_2 = arith.constant 0 : i32
    return %c0_i32, %c0_i32_0, %c0_i32_1 : i32, i32, i32
  }
  func.func @transform_3(%arg0: i32) -> (i32, i32) {
    %c0_i32 = arith.constant 0 : i32
    %c0_i32_0 = arith.constant 0 : i32
    return %arg0, %c0_i32 : i32, i32
  }
}

</mosaic_0001>

<llo_original>
// kernel: tpu_custom_call.1
$region0: #{tpu_custom_call.1}
  #allocation0 [shape = 'u32[]', space=smem, size = 0x4, offset = 0x4, fixed_abs, tag = 'smem constant byte address 0x4 - core index']
  #allocation1 [shape = 'u32[144,128]{1,0:T(1,128)}', space=vmem, size = 0x12000, scoped, tag = 'internal scratch']
  %s0 = inlined_call_operand.hbm [shape: f32[2,8], index: 0, kind: input, shape index: {}]
  %s1 = inlined_call_operand.vmem [shape: f32[1,8], index: 1, kind: input, shape index: {}]
  %s2 = inlined_call_operand.hbm [shape: f32[4,136,128], index: 2, kind: input, shape index: {}]
  %s3 = inlined_call_operand.hbm [shape: f32[2,128], index: 3, kind: output, shape index: {}]
  %s4 = sld [smem:[#allocation0]]
  $region30: #{tpu_custom_call.1} parent=0
    _
  %s6 = ssub.s32 1, %s4
  %s7 = scalar_select 0, %s6, %s4
  $region1: #{tpu_custom_call.1} parent=0
    #allocation2 [shape = 'u8[1024]{0}', space=vmem, size = 0x400, scoped, tag = 'input window, operand 0, single buffered']
    #allocation3 [shape = 's32[1]{0}', space=sflag, size = 0x4, scoped, tag = 'scoped memory for tpu_custom_call.1']
    #allocation4 [shape = 's32[1]{0}', space=sflag, size = 0x4, scoped, tag = 'scoped memory for tpu_custom_call.1']
    #allocation5 [shape = 'u8[278528]{0}', space=vmem, size = 0x44000, scoped, tag = 'input window, operand 2, single buffered']
    #allocation6 [shape = 's32[1]{0}', space=sflag, size = 0x4, scoped, tag = 'scoped memory for tpu_custom_call.1']
    #allocation7 [shape = 'u8[1024]{0}', space=vmem, size = 0x400, scoped, tag = 'output window, operand 0, single buffered']
    %8 = vsyncpa [#allocation3], 0
    %9 = vsyncpa [#allocation6], 0
    %10 = vsyncpa [#allocation4], 0
    // Predicated region
    $region2: #{tpu_custom_call.1} parent=1 // pred_check
      _
    $region3: #{tpu_custom_call.1} parent=1 // pred_check_branch
      %12 = sbr.rel (0) target = $region5
    $region4: #{tpu_custom_call.1} parent=1 // pred_region
      %s14 = ssub.s32 32, 32
      %15 = vsyncadd [#allocation3], %s14
      %s17 = sshll.u32 [#allocation2], 4
      %s18 = int_to_ptr.vmem [resolvable:$true] %s17
      %20 = dma.hbm_to_vmem [thread:$0]  %s0, 32, %s18, [#allocation3]
    $region5: #{tpu_custom_call.1} parent=1 // pred_fallthru
      _
    // Predicated region
    $region6: #{tpu_custom_call.1} parent=1 // pred_check
      _
    $region7: #{tpu_custom_call.1} parent=1 // pred_check_branch
      %22 = sbr.rel (0) target = $region9
    $region8: #{tpu_custom_call.1} parent=1 // pred_region
      _
    $region9: #{tpu_custom_call.1} parent=1 // pred_fallthru
      _
    // Predicated region
    $region10: #{tpu_custom_call.1} parent=1 // pred_check
      _
    $region11: #{tpu_custom_call.1} parent=1 // pred_check_branch
      %24 = sbr.rel (0) target = $region13
    $region12: #{tpu_custom_call.1} parent=1 // pred_region
      %s26 = ssub.s32 8704, 8704
      %27 = vsyncadd [#allocation6], %s26
      %s28 = sshll.u32 [#allocation5], 4
      %s29 = int_to_ptr.vmem [resolvable:$true] %s28
      %34 = dma.hbm_to_vmem [thread:$0]  %s2, 8704, %s29, [#allocation6], 128, 128, 8
    $region13: #{tpu_custom_call.1} parent=1 // pred_fallthru
      _
    // Predicated region
    $region14: #{tpu_custom_call.1} parent=1 // pred_check
      _
    $region15: #{tpu_custom_call.1} parent=1 // pred_check_branch
      %36 = sbr.rel (0) target = $region17
    $region16: #{tpu_custom_call.1} parent=1 // pred_region
      %37 = dma.done [#allocation3], 32
    $region17: #{tpu_custom_call.1} parent=1 // pred_fallthru
      _
    // Predicated region
    $region18: #{tpu_custom_call.1} parent=1 // pred_check
      _
    $region19: #{tpu_custom_call.1} parent=1 // pred_check_branch
      %39 = sbr.rel (0) target = $region21
    $region20: #{tpu_custom_call.1} parent=1 // pred_region
      %40 = dma.done [#allocation6], 8704
    $region21: #{tpu_custom_call.1} parent=1 // pred_fallthru
      _
    %v41 = vld [vmem:[#allocation2] sm:$0x3]
    %v42 = vld [vmem:[%s1] sm:$0x1]
    %v43 = vmul.f32 %v42, 0.1
    %v45 = vlaneseq
    %v46 = vshrl.u32 %v45, 7
    %v47 = vsub.s32 0, %v46
    %v48 = vrot.slane %v43, %v47
    %v50 = vadd.f32 %v41, %v48
    %v51 = vld [vmem:[#allocation5] sm:$0xff]
    %v52 = vld [vmem:[#allocation5 + $0x80] sm:$0x1]
    %v53 = vlaneseq
    %v54 = vshrl.u32 %v53, 7
    %v55 = vsub.s32 0, %v54
    %v56 = vrot.slane %v52, %v55
    %vm57 = vcmask 64512
    %v59 = vsel %vm57, %v50, 0
    %61 = vmatprep.subr.mxu0 0.0
    %62 = vmatpush1.msra.mxu0 %v51
    %63 = vmatprep.subr.mxu0 0.0
    %64 = vmatpush1.msra.mxu0 0.0
    %65 = vmatprep.subr.mxu0 0.0
    %66 = vmatpush1.msra.mxu0 0.0
    %67 = vmatprep.subr.mxu0 0.0
    %68 = vmatpush1.msra.mxu0 0.0
    %69 = vmatprep.subr.mxu0 0.0
    %70 = vmatpush1.msra.mxu0 0.0
    %71 = vmatprep.subr.mxu0 0.0
    %72 = vmatpush1.msra.mxu0 0.0
    %73 = vmatprep.subr.mxu0 0.0
    %74 = vmatpush1.msra.mxu0 0.0
    %75 = vmatprep.subr.mxu0 0.0
    %76 = vmatpush1.msra.mxu0 0.0
    %77 = vmatprep.subr.mxu0 0.0
    %78 = vmatpush1.msra.mxu0 0.0
    %79 = vmatprep.subr.mxu0 0.0
    %80 = vmatpush1.msra.mxu0 0.0
    %81 = vmatprep.subr.mxu0 0.0
    %82 = vmatpush1.msra.mxu0 0.0
    %83 = vmatprep.subr.mxu0 0.0
    %84 = vmatpush1.msra.mxu0 0.0
    %85 = vmatprep.subr.mxu0 0.0
    %86 = vmatpush1.msra.mxu0 0.0
    %87 = vmatprep.subr.mxu0 0.0
    %88 = vmatpush1.msra.mxu0 0.0
    %89 = vmatprep.subr.mxu0 0.0
    %90 = vmatpush1.msra.mxu0 0.0
    %91 = vmatprep.subr.mxu0 0.0
    %92 = vmatpush1.msra.mxu0 0.0
    %93 = vmatprep.subr.mxu0 0.0
    %94 = vmatpush1.msra.mxu0 0.0
    %95 = vmatprep.subr.mxu0 0.0
    %96 = vmatpush1.msra.mxu0 0.0
    %97 = vmatprep.subr.mxu0 0.0
    %98 = vmatpush1.msra.mxu0 0.0
    %99 = vmatprep.subr.mxu0 0.0
    %100 = vmatpush1.msra.mxu0 0.0
    %101 = vmatprep.subr.mxu0 0.0
    %102 = vmatpush1.msra.mxu0 0.0
    %103 = vmatprep.subr.mxu0 0.0
    %104 = vmatpush1.msra.mxu0 0.0
    %105 = vmatprep.subr.mxu0 0.0
    %106 = vmatpush1.msra.mxu0 0.0
    %107 = vmatprep.subr.mxu0 0.0
    %108 = vmatpush1.msra.mxu0 0.0
    %109 = vmatprep.subr.mxu0 0.0
    %110 = vmatpush1.msra.mxu0 0.0
    %111 = vmatprep.subr.mxu0 0.0
    %112 = vmatpush1.msra.mxu0 0.0
    %113 = vmatprep.subr.mxu0 0.0
    %114 = vmatpush1.msra.mxu0 0.0
    %115 = vmatprep.subr.mxu0 0.0
    %116 = vmatpush1.msra.mxu0 0.0
    %117 = vmatprep.subr.mxu0 0.0
    %118 = vmatpush1.msra.mxu0 0.0
    %119 = vmatprep.subr.mxu0 0.0
    %120 = vmatpush1.msra.mxu0 0.0
    %121 = vmatprep.subr.mxu0 0.0
    %122 = vmatpush1.msra.mxu0 0.0
    %123 = vmatprep.subr.mxu0 0.0
    %124 = vmatpush1.msra.mxu0 0.0
    %125 = vmatprep.mubr.f32.mxu0 0.0
    %126 = vmatmul.mubr.f32.gmra.mrb[0].mxu0 %v59
    %v127 = vpop.f32.mrb[0].mxu0
    %v128 = vadd.f32 %v56, %v127
    %v129 = vpop.f32.mrb[0].mxu0
    %130 = vdwg.mxu0
    %v131 = vtanh.pop %v128
    %s132 = scalar_lea.vmem [#allocation5], 136
    %v133 = vld [vmem:[%s132] sm:$0xff]
    %v134 = vld [vmem:[%s132 + $0x8] sm:$0xff]
    %v135 = vld [vmem:[%s132 + $0x10] sm:$0xff]
    %v136 = vld [vmem:[%s132 + $0x18] sm:$0xff]
    %v137 = vld [vmem:[%s132 + $0x20] sm:$0xff]
    %v138 = vld [vmem:[%s132 + $0x28] sm:$0xff]
    %v139 = vld [vmem:[%s132 + $0x30] sm:$0xff]
    %v140 = vld [vmem:[%s132 + $0x38] sm:$0xff]
    %v141 = vld [vmem:[%s132 + $0x40] sm:$0xff]
    %v142 = vld [vmem:[%s132 + $0x48] sm:$0xff]
    %v143 = vld [vmem:[%s132 + $0x50] sm:$0xff]
    %v144 = vld [vmem:[%s132 + $0x58] sm:$0xff]
    %v145 = vld [vmem:[%s132 + $0x60] sm:$0xff]
    %v146 = vld [vmem:[%s132 + $0x68] sm:$0xff]
    %v147 = vld [vmem:[%s132 + $0x70] sm:$0xff]
    %v148 = vld [vmem:[%s132 + $0x78] sm:$0xff]
    %v149 = vld [vmem:[%s132 + $0x80] sm:$0x1]
    %v150 = vlaneseq
    %v151 = vshrl.u32 %v150, 7
    %v152 = vsub.s32 0, %v151
    %v153 = vrot.slane %v149, %v152
    %154 = vmatprep.subr.mxu0 0.0
    %155 = vmatpush1.msra.mxu0 %v133
    %156 = vmatprep.subr.mxu0 0.0
    %157 = vmatpush1.msra.mxu0 %v134
    %158 = vmatprep.subr.mxu0 0.0
    %159 = vmatpush1.msra.mxu0 %v135
    %160 = vmatprep.subr.mxu0 0.0
    %161 = vmatpush1.msra.mxu0 %v136
    %162 = vmatprep.subr.mxu0 0.0
    %163 = vmatpush1.msra.mxu0 %v137
    %164 = vmatprep.subr.mxu0 0.0
    %165 = vmatpush1.msra.mxu0 %v138
    %166 = vmatprep.subr.mxu0 0.0
    %167 = vmatpush1.msra.mxu0 %v139
    %168 = vmatprep.subr.mxu0 0.0
    %169 = vmatpush1.msra.mxu0 %v140
    %170 = vmatprep.subr.mxu0 0.0
    %171 = vmatpush1.msra.mxu0 %v141
    %172 = vmatprep.subr.mxu0 0.0
    %173 = vmatpush1.msra.mxu0 %v142
    %174 = vmatprep.subr.mxu0 0.0
    %175 = vmatpush1.msra.mxu0 %v143
    %176 = vmatprep.subr.mxu0 0.0
    %177 = vmatpush1.msra.mxu0 %v144
    %178 = vmatprep.subr.mxu0 0.0
    %179 = vmatpush1.msra.mxu0 %v145
    %180 = vmatprep.subr.mxu0 0.0
    %181 = vmatpush1.msra.mxu0 %v146
    %182 = vmatprep.subr.mxu0 0.0
    %183 = vmatpush1.msra.mxu0 %v147
    %184 = vmatprep.subr.mxu0 0.0
    %185 = vmatpush1.msra.mxu0 %v148
    %186 = vmatprep.subr.mxu0 0.0
    %187 = vmatpush1.msra.mxu0 0.0
    %188 = vmatprep.subr.mxu0 0.0
    %189 = vmatpush1.msra.mxu0 0.0
    %190 = vmatprep.subr.mxu0 0.0
    %191 = vmatpush1.msra.mxu0 0.0
    %192 = vmatprep.subr.mxu0 0.0
    %193 = vmatpush1.msra.mxu0 0.0
    %194 = vmatprep.subr.mxu0 0.0
    %195 = vmatpush1.msra.mxu0 0.0
    %196 = vmatprep.subr.mxu0 0.0
    %197 = vmatpush1.msra.mxu0 0.0
    %198 = vmatprep.subr.mxu0 0.0
    %199 = vmatpush1.msra.mxu0 0.0
    %200 = vmatprep.subr.mxu0 0.0
    %201 = vmatpush1.msra.mxu0 0.0
    %202 = vmatprep.subr.mxu0 0.0
    %203 = vmatpush1.msra.mxu0 0.0
    %204 = vmatprep.subr.mxu0 0.0
    %205 = vmatpush1.msra.mxu0 0.0
    %206 = vmatprep.subr.mxu0 0.0
    %207 = vmatpush1.msra.mxu0 0.0
    %208 = vmatprep.subr.mxu0 0.0
    %209 = vmatpush1.msra.mxu0 0.0
    %210 = vmatprep.subr.mxu0 0.0
    %211 = vmatpush1.msra.mxu0 0.0
    %212 = vmatprep.subr.mxu0 0.0
    %213 = vmatpush1.msra.mxu0 0.0
    %214 = vmatprep.subr.mxu0 0.0
    %215 = vmatpush1.msra.mxu0 0.0
    %216 = vmatprep.subr.mxu0 0.0
    %217 = vmatpush1.msra.mxu0 0.0
    %218 = vmatprep.mubr.f32.mxu0 0.0
    %219 = vmatmul.mubr.f32.gmra.mrb[0].mxu0 %v131
    %v220 = vpop.f32.mrb[0].mxu0
    %v221 = vadd.f32 %v153, %v220
    %v222 = vpop.f32.mrb[0].mxu0
    %223 = vdwg.mxu0
    %v224 = vtanh.pop %v221
    %s225 = scalar_lea.vmem [#allocation5], 272
    %v226 = vld [vmem:[%s225] sm:$0xff]
    %v227 = vld [vmem:[%s225 + $0x8] sm:$0xff]
    %v228 = vld [vmem:[%s225 + $0x10] sm:$0xff]
    %v229 = vld [vmem:[%s225 + $0x18] sm:$0xff]
    %v230 = vld [vmem:[%s225 + $0x20] sm:$0xff]
    %v231 = vld [vmem:[%s225 + $0x28] sm:$0xff]
    %v232 = vld [vmem:[%s225 + $0x30] sm:$0xff]
    %v233 = vld [vmem:[%s225 + $0x38] sm:$0xff]
    %v234 = vld [vmem:[%s225 + $0x40] sm:$0xff]
    %v235 = vld [vmem:[%s225 + $0x48] sm:$0xff]
    %v236 = vld [vmem:[%s225 + $0x50] sm:$0xff]
    %v237 = vld [vmem:[%s225 + $0x58] sm:$0xff]
    %v238 = vld [vmem:[%s225 + $0x60] sm:$0xff]
    %v239 = vld [vmem:[%s225 + $0x68] sm:$0xff]
    %v240 = vld [vmem:[%s225 + $0x70] sm:$0xff]
    %v241 = vld [vmem:[%s225 + $0x78] sm:$0xff]
    %v242 = vld [vmem:[%s225 + $0x80] sm:$0x1]
    %v243 = vlaneseq
    %v244 = vshrl.u32 %v243, 7
    %v245 = vsub.s32 0, %v244
    %v246 = vrot.slane %v242, %v245
    %247 = vmatprep.subr.mxu0 0.0
    %248 = vmatpush1.msra.mxu0 %v226
    %249 = vmatprep.subr.mxu0 0.0
    %250 = vmatpush1.msra.mxu0 %v227
    %251 = vmatprep.subr.mxu0 0.0
    %252 = vmatpush1.msra.mxu0 %v228
    %253 = vmatprep.subr.mxu0 0.0
    %254 = vmatpush1.msra.mxu0 %v229
    %255 = vmatprep.subr.mxu0 0.0
    %256 = vmatpush1.msra.mxu0 %v230
    %257 = vmatprep.subr.mxu0 0.0
    %258 = vmatpush1.msra.mxu0 %v231
    %259 = vmatprep.subr.mxu0 0.0
    %260 = vmatpush1.msra.mxu0 %v232
    %261 = vmatprep.subr.mxu0 0.0
    %262 = vmatpush1.msra.mxu0 %v233
    %263 = vmatprep.subr.mxu0 0.0
    %264 = vmatpush1.msra.mxu0 %v234
    %265 = vmatprep.subr.mxu0 0.0
    %266 = vmatpush1.msra.mxu0 %v235
    %267 = vmatprep.subr.mxu0 0.0
    %268 = vmatpush1.msra.mxu0 %v236
    %269 = vmatprep.subr.mxu0 0.0
    %270 = vmatpush1.msra.mxu0 %v237
    %271 = vmatprep.subr.mxu0 0.0
    %272 = vmatpush1.msra.mxu0 %v238
    %273 = vmatprep.subr.mxu0 0.0
    %274 = vmatpush1.msra.mxu0 %v239
    %275 = vmatprep.subr.mxu0 0.0
    %276 = vmatpush1.msra.mxu0 %v240
    %277 = vmatprep.subr.mxu0 0.0
    %278 = vmatpush1.msra.mxu0 %v241
    %279 = vmatprep.subr.mxu0 0.0
    %280 = vmatpush1.msra.mxu0 0.0
    %281 = vmatprep.subr.mxu0 0.0
    %282 = vmatpush1.msra.mxu0 0.0
    %283 = vmatprep.subr.mxu0 0.0
    %284 = vmatpush1.msra.mxu0 0.0
    %285 = vmatprep.subr.mxu0 0.0
    %286 = vmatpush1.msra.mxu0 0.0
    %287 = vmatprep.subr.mxu0 0.0
    %288 = vmatpush1.msra.mxu0 0.0
    %289 = vmatprep.subr.mxu0 0.0
    %290 = vmatpush1.msra.mxu0 0.0
    %291 = vmatprep.subr.mxu0 0.0
    %292 = vmatpush1.msra.mxu0 0.0
    %293 = vmatprep.subr.mxu0 0.0
    %294 = vmatpush1.msra.mxu0 0.0
    %295 = vmatprep.subr.mxu0 0.0
    %296 = vmatpush1.msra.mxu0 0.0
    %297 = vmatprep.subr.mxu0 0.0
    %298 = vmatpush1.msra.mxu0 0.0
    %299 = vmatprep.subr.mxu0 0.0
    %300 = vmatpush1.msra.mxu0 0.0
    %301 = vmatprep.subr.mxu0 0.0
    %302 = vmatpush1.msra.mxu0 0.0
    %303 = vmatprep.subr.mxu0 0.0
    %304 = vmatpush1.msra.mxu0 0.0
    %305 = vmatprep.subr.mxu0 0.0
    %306 = vmatpush1.msra.mxu0 0.0
    %307 = vmatprep.subr.mxu0 0.0
    %308 = vmatpush1.msra.mxu0 0.0
    %309 = vmatprep.subr.mxu0 0.0
    %310 = vmatpush1.msra.mxu0 0.0
    %311 = vmatprep.mubr.f32.mxu0 0.0
    %312 = vmatmul.mubr.f32.gmra.mrb[0].mxu0 %v224
    %v313 = vpop.f32.mrb[0].mxu0
    %v314 = vadd.f32 %v246, %v313
    %v315 = vpop.f32.mrb[0].mxu0
    %316 = vdwg.mxu0
    %v317 = vtanh.pop %v314
    %s318 = scalar_lea.vmem [#allocation5], 408
    %v319 = vld [vmem:[%s318] sm:$0xff]
    %v320 = vld [vmem:[%s318 + $0x8] sm:$0xff]
    %v321 = vld [vmem:[%s318 + $0x10] sm:$0xff]
    %v322 = vld [vmem:[%s318 + $0x18] sm:$0xff]
    %v323 = vld [vmem:[%s318 + $0x20] sm:$0xff]
    %v324 = vld [vmem:[%s318 + $0x28] sm:$0xff]
    %v325 = vld [vmem:[%s318 + $0x30] sm:$0xff]
    %v326 = vld [vmem:[%s318 + $0x38] sm:$0xff]
    %v327 = vld [vmem:[%s318 + $0x40] sm:$0xff]
    %v328 = vld [vmem:[%s318 + $0x48] sm:$0xff]
    %v329 = vld [vmem:[%s318 + $0x50] sm:$0xff]
    %v330 = vld [vmem:[%s318 + $0x58] sm:$0xff]
    %v331 = vld [vmem:[%s318 + $0x60] sm:$0xff]
    %v332 = vld [vmem:[%s318 + $0x68] sm:$0xff]
    %v333 = vld [vmem:[%s318 + $0x70] sm:$0xff]
    %v334 = vld [vmem:[%s318 + $0x78] sm:$0xff]
    %v335 = vld [vmem:[%s318 + $0x80] sm:$0x1]
    %v336 = vlaneseq
    %v337 = vshrl.u32 %v336, 7
    %v338 = vsub.s32 0, %v337
    %v339 = vrot.slane %v335, %v338
    %340 = vmatprep.subr.mxu0 0.0
    %341 = vmatpush1.msra.mxu0 %v319
    %342 = vmatprep.subr.mxu0 0.0
    %343 = vmatpush1.msra.mxu0 %v320
    %344 = vmatprep.subr.mxu0 0.0
    %345 = vmatpush1.msra.mxu0 %v321
    %346 = vmatprep.subr.mxu0 0.0
    %347 = vmatpush1.msra.mxu0 %v322
    %348 = vmatprep.subr.mxu0 0.0
    %349 = vmatpush1.msra.mxu0 %v323
    %350 = vmatprep.subr.mxu0 0.0
    %351 = vmatpush1.msra.mxu0 %v324
    %352 = vmatprep.subr.mxu0 0.0
    %353 = vmatpush1.msra.mxu0 %v325
    %354 = vmatprep.subr.mxu0 0.0
    %355 = vmatpush1.msra.mxu0 %v326
    %356 = vmatprep.subr.mxu0 0.0
    %357 = vmatpush1.msra.mxu0 %v327
    %358 = vmatprep.subr.mxu0 0.0
    %359 = vmatpush1.msra.mxu0 %v328
    %360 = vmatprep.subr.mxu0 0.0
    %361 = vmatpush1.msra.mxu0 %v329
    %362 = vmatprep.subr.mxu0 0.0
    %363 = vmatpush1.msra.mxu0 %v330
    %364 = vmatprep.subr.mxu0 0.0
    %365 = vmatpush1.msra.mxu0 %v331
    %366 = vmatprep.subr.mxu0 0.0
    %367 = vmatpush1.msra.mxu0 %v332
    %368 = vmatprep.subr.mxu0 0.0
    %369 = vmatpush1.msra.mxu0 %v333
    %370 = vmatprep.subr.mxu0 0.0
    %371 = vmatpush1.msra.mxu0 %v334
    %372 = vmatprep.subr.mxu0 0.0
    %373 = vmatpush1.msra.mxu0 0.0
    %374 = vmatprep.subr.mxu0 0.0
    %375 = vmatpush1.msra.mxu0 0.0
    %376 = vmatprep.subr.mxu0 0.0
    %377 = vmatpush1.msra.mxu0 0.0
    %378 = vmatprep.subr.mxu0 0.0
    %379 = vmatpush1.msra.mxu0 0.0
    %380 = vmatprep.subr.mxu0 0.0
    %381 = vmatpush1.msra.mxu0 0.0
    %382 = vmatprep.subr.mxu0 0.0
    %383 = vmatpush1.msra.mxu0 0.0
    %384 = vmatprep.subr.mxu0 0.0
    %385 = vmatpush1.msra.mxu0 0.0
    %386 = vmatprep.subr.mxu0 0.0
    %387 = vmatpush1.msra.mxu0 0.0
    %388 = vmatprep.subr.mxu0 0.0
    %389 = vmatpush1.msra.mxu0 0.0
    %390 = vmatprep.subr.mxu0 0.0
    %391 = vmatpush1.msra.mxu0 0.0
    %392 = vmatprep.subr.mxu0 0.0
    %393 = vmatpush1.msra.mxu0 0.0
    %394 = vmatprep.subr.mxu0 0.0
    %395 = vmatpush1.msra.mxu0 0.0
    %396 = vmatprep.subr.mxu0 0.0
    %397 = vmatpush1.msra.mxu0 0.0
    %398 = vmatprep.subr.mxu0 0.0
    %399 = vmatpush1.msra.mxu0 0.0
    %400 = vmatprep.subr.mxu0 0.0
    %401 = vmatpush1.msra.mxu0 0.0
    %402 = vmatprep.subr.mxu0 0.0
    %403 = vmatpush1.msra.mxu0 0.0
    %404 = vmatprep.mubr.f32.mxu0 0.0
    %405 = vmatmul.mubr.f32.gmra.mrb[0].mxu0 %v317
    %v406 = vpop.f32.mrb[0].mxu0
    %v407 = vadd.f32 %v339, %v406
    %v408 = vpop.f32.mrb[0].mxu0
    %409 = vdwg.mxu0
    %vm410 = vcmask 1041408
    %v411 = vsel %vm410, %v407, -inf
    %412 = vmax.xlane.f32.xlu0 %v411
    %v413 = vpop.xlane.xlu0 %412
    %v414 = vsub.f32 %v407, %v413
    %v415 = vmul.f32 %v414, 1.442695
    %v416 = vpow.pop %v415
    %v417 = vsel %vm410, %v416, 0.0
    %418 = vadd.xlane.f32.xlu0 %v417
    %v419 = vpop.xlane.xlu0 %418
    %v420 = vrcp.pop %v419
    %v421 = vmul.f32 %v416, %v420
    %422 = vst [vmem:[#allocation7] sm:$0x3] %v421
    // Predicated region
    $region22: #{tpu_custom_call.1} parent=1 // pred_check
      _
    $region23: #{tpu_custom_call.1} parent=1 // pred_check_branch
      %424 = sbr.rel (0) target = $region25
    $region24: #{tpu_custom_call.1} parent=1 // pred_region
      %s426 = ssub.s32 32, 32
      %427 = vsyncadd [#allocation4], %s426
      %s429 = sshll.u32 [#allocation7], 4
      %s430 = int_to_ptr.vmem [resolvable:$true] %s429
      %432 = dma.vmem_to_hbm [thread:$0]  %s430, 32, %s3, [#allocation4]
    $region25: #{tpu_custom_call.1} parent=1 // pred_fallthru
      _
    // Predicated region
    $region26: #{tpu_custom_call.1} parent=1 // pred_check
      _
    $region27: #{tpu_custom_call.1} parent=1 // pred_check_branch
      %434 = sbr.rel (0) target = $region29
    $region28: #{tpu_custom_call.1} parent=1 // pred_region
      %435 = dma.done [#allocation4], 32
    $region29: #{tpu_custom_call.1} parent=1 // pred_fallthru
      _
    %436 = vsyncpa [#allocation3], 1
    %437 = vsyncpa [#allocation6], 1
    %438 = vsyncpa [#allocation4], 1

</llo_original>
